<compile_context>
chip_gen: v5e
topology: v5e:2x2
jax: 0.10.0
libtpu: 0.0.40
codegen_flags: <defaults>
</compile_context>

<pallas_src>
import jax
import jax.numpy as jnp
from jax.experimental import pallas as pl
from jax.experimental.pallas import tpu as pltpu


# ----------------------------- kernels -----------------------------

def _minish_soft_kernel(scale_ref, x_ref, o_ref, m_acc, den_acc, num_acc):
    """Online softmin over grid axis 1 (the chunked reduce axis).

    x_ref: (TN, TM) block.  Accumulators (1, TM): running max of z=-x*scale,
    running denominator sum(e), running numerator sum(e*x).
    """
    n_i = pl.program_id(1)

    @pl.when(n_i == 0)
    def _init():
        m_acc[...] = jnp.full(m_acc.shape, -jnp.inf, jnp.float32)
        den_acc[...] = jnp.zeros(den_acc.shape, jnp.float32)
        num_acc[...] = jnp.zeros(num_acc.shape, jnp.float32)

    scale = scale_ref[0]
    x = x_ref[...].astype(jnp.float32)                     # (TN, TM)
    z = x * (-scale)

    m_prev = m_acc[...]                                     # (1, TM)
    m_new = jnp.maximum(m_prev, jnp.max(z, axis=0, keepdims=True))
    alpha = jnp.exp(m_prev - m_new)                         # rescale old partials
    e = jnp.exp(z - m_new)                                  # (TN, TM)

    den_acc[...] = alpha * den_acc[...] + jnp.sum(e, axis=0, keepdims=True)
    num_acc[...] = alpha * num_acc[...] + jnp.sum(e * x, axis=0, keepdims=True)
    m_acc[...] = m_new

    @pl.when(n_i == pl.num_programs(1) - 1)
    def _finalize():
        inv = pl.reciprocal(den_acc[...], approx=False)     # only (1, TM)
        o_ref[...] = (num_acc[...] * inv).astype(o_ref.dtype)


def _minish_min_kernel(scale_ref, x_ref, o_ref, min_acc):
    """Hard min over grid axis 1 (the chunked reduce axis)."""
    del scale_ref  # unused on the hard path
    n_i = pl.program_id(1)

    @pl.when(n_i == 0)
    def _init():
        min_acc[...] = jnp.full(min_acc.shape, jnp.inf, jnp.float32)

    x = x_ref[...].astype(jnp.float32)
    min_acc[...] = jnp.minimum(min_acc[...], jnp.min(x, axis=0, keepdims=True))

    @pl.when(n_i == pl.num_programs(1) - 1)
    def _finalize():
        o_ref[...] = min_acc[...].astype(o_ref.dtype)


# ----------------------------- wrapper -----------------------------

def _round_up(a, b):
    return (a + b - 1) // b * b


def minish(x, scale, dim=1, keepdim=True, *,
           max_lane_tile=2048, block_budget_bytes=6 * 1024 * 1024):
    """Pallas equivalent of Minish.forward(x, scale, dim, keepdim).

    `scale` must be a concrete Python/numpy scalar (same restriction as the
    PyTorch module, which also branches on `scale > 0` in Python); its *value*
    is passed to the kernel through SMEM so changing it does not recompile.
    """
    x = jnp.asarray(x)
    if not jnp.issubdtype(x.dtype, jnp.floating):
        x = x.astype(jnp.float32)
    ndim = x.ndim
    dim = dim % ndim

    N = x.shape[dim]
    rest_shape = tuple(s for i, s in enumerate(x.shape) if i != dim)
    M = 1
    for s in rest_shape:
        M *= s

    soft = bool(scale > 0)  # host-side dispatch, mirrors the PyTorch module

    # Canonical 2-D [reduce, everything-else]; lane axis = all non-reduced dims.
    x2 = jnp.moveaxis(x, dim, 0).reshape(N, M)

    # ---- lane tiling (parallel grid axis) ----
    if M <= max_lane_tile:
        TM, M_pad, grid_m = M, M, 1           # full dim -> no 128 constraint
    else:
        TM = max_lane_tile                    # multiple of 128
        M_pad = _round_up(M, TM)
        grid_m = M_pad // TM

    # ---- reduce-axis chunking (arbitrary grid axis) to bound VMEM per block ----
    bytes_per_row = TM * 4
    max_tn = max(8, (block_budget_bytes // bytes_per_row) // 8 * 8)
    if N <= max_tn:
        TN, N_pad, grid_n = N, N, 1
    else:
        TN = max_tn
        N_pad = _round_up(N, TN)
        grid_n = N_pad // TN

    if (N_pad, M_pad) != (N, M):
        # Neutral padding: +inf rows never win a min; the huge-but-finite value
        # underflows exp() to exactly 0 in the softmin path (so 0 * 1e30 == 0,
        # no NaN).  Padded lanes are sliced off below.
        pad_val = 1e30 if soft else jnp.inf
        x2 = jnp.pad(x2, ((0, N_pad - N), (0, M_pad - M)),
                     constant_values=pad_val)

    if soft:
        kernel = _minish_soft_kernel
        scratch = [pltpu.VMEM((1, TM), jnp.float32)] * 3   # m, den, num
    else:
        kernel = _minish_min_kernel
        scratch = [pltpu.VMEM((1, TM), jnp.float32)]       # running min

    out2 = pl.pallas_call(
        kernel,
        out_shape=jax.ShapeDtypeStruct((1, M_pad), x.dtype),
        grid_spec=pltpu.PrefetchScalarGridSpec(
            num_scalar_prefetch=1,                          # scale -> SMEM
            grid=(grid_m, grid_n),                          # reduce axis last
            in_specs=[pl.BlockSpec((TN, TM), lambda m, n, s: (n, m))],
            out_specs=pl.BlockSpec((1, TM), lambda m, n, s: (0, m)),
            scratch_shapes=scratch,
        ),
        compiler_params=pltpu.CompilerParams(
            dimension_semantics=("parallel", "arbitrary"),
            vmem_limit_bytes=32 * 1024 * 1024,              # fits v5e/v6e/v7x
        ),
    )(jnp.array([float(scale)], jnp.float32), x2)

    # Restore original layout (moveaxis preserves the order of the other dims).
    out = out2[0, :M].reshape(rest_shape)
    if keepdim:
        out = jnp.expand_dims(out, dim)
    return out
    # TODO(synk): optional bf16 compute path on v6e/v7x (keep f32 accumulators)
    # for bf16 inputs; test inputs are f32 so full-f32 compute is used everywhere.


# ----------------------------- reference (pure JAX) -----------------------------

def minish_ref(x, scale, dim=1, keepdim=True):
    if scale > 0:
        w = jax.nn.softmax(-x * scale, axis=dim)
        return jnp.sum(w * x, axis=dim, keepdims=keepdim)
    else:
        return jnp.min(x, axis=dim, keepdims=keepdim)


# ----------------------------- main -----------------------------

if __name__ == "__main__":
    key = jax.random.PRNGKey(0)
    B, N, D = 2, 8, 32  # [batch_size, trace_length, x_dim]
    x = jax.random.normal(key, (B, N, D), dtype=jnp.float32)

    # Hard-min path (scale <= 0), default dim=1, keepdim=True — Minish() default use.
    y_hard = jax.block_until_ready(minish(x, scale=-1, dim=1, keepdim=True))
    # Softmin path (scale > 0).
    y_soft = jax.block_until_ready(minish(x, scale=2.0, dim=1, keepdim=True))

    # `And` usage: reduce over a trailing stacked dim of size 2, keepdim=False.
    xx = jnp.stack([x, -x], axis=-1)  # (B, N, D, 2)
    y_and = jax.block_until_ready(minish(xx, scale=-1, dim=-1, keepdim=False))
    y_and_soft = jax.block_until_ready(minish(xx, scale=0.5, dim=-1, keepdim=False))

    # Exercise lane tiling + reduce-axis chunking (forced small tiles + padding).
    xb = jax.random.normal(jax.random.PRNGKey(1), (2, 20, 200), dtype=jnp.float32)
    y_big_hard = jax.block_until_ready(
        minish(xb, scale=-1, dim=1, keepdim=True,
               max_lane_tile=128, block_budget_bytes=4096))
    y_big_soft = jax.block_until_ready(
        minish(xb, scale=1.5, dim=1, keepdim=True,
               max_lane_tile=128, block_budget_bytes=4096))

    # Correctness checks against the pure-JAX reference.
    assert y_hard.shape == (B, 1, D)
    assert y_soft.shape == (B, 1, D)
    assert y_and.shape == (B, N, D)
    assert jnp.allclose(y_hard, minish_ref(x, -1, 1, True), atol=1e-6)
    assert jnp.allclose(y_soft, minish_ref(x, 2.0, 1, True), atol=1e-5)
    assert jnp.allclose(y_and, minish_ref(xx, -1, -1, False), atol=1e-6)
    assert jnp.allclose(y_and_soft, minish_ref(xx, 0.5, -1, False), atol=1e-5)
    assert jnp.allclose(y_big_hard, minish_ref(xb, -1, 1, True), atol=1e-6)
    assert jnp.allclose(y_big_soft, minish_ref(xb, 1.5, 1, True), atol=1e-5)

    print("KERNEL_OK")
</pallas_src>

<mosaic_0001>
module attributes {stable_mosaic.version = 11 : i64} {
  func.func @_minish_min_kernel(%arg0: i32, %arg1: i32, %arg2: memref<1xf32, #tpu.memory_space<smem>>, %arg3: memref<8x64xf32, #tpu.memory_space<vmem>>, %arg4: memref<1x64xf32, #tpu.memory_space<vmem>>, %arg5: memref<1x64xf32, #tpu.memory_space<vmem>>) attributes {dimension_semantics = [#tpu.dimension_semantics<parallel>, #tpu.dimension_semantics<arbitrary>], iteration_bounds = array<i64: 1, 1>, scalar_prefetch = 1 : i64, scratch_operands = 1 : i64, tpu.core_type = #tpu.core_type<tc>, window_params = [{transform_indices = @transform_0, window_bounds = array<i64: 8, 64>}, {transform_indices = @transform_1, window_bounds = array<i64: 1, 64>}]} {
    %c0_i32 = arith.constant 0 : i32
    %0 = arith.cmpi eq, %arg1, %c0_i32 : i32
    %1 = arith.extui %0 : i1 to i32
    %c0_i32_0 = arith.constant 0 : i32
    %2 = arith.cmpi ne, %1, %c0_i32_0 : i32
    scf.if %2 {
      %cst_8 = arith.constant 0x7F800000 : f32
      %12 = vector.broadcast %cst_8 : f32 to vector<1x64xf32>
      %c0_9 = arith.constant 0 : index
      %c0_10 = arith.constant 0 : index
      %13 = vector.load %arg5[%c0_9, %c0_10] : memref<1x64xf32, #tpu.memory_space<vmem>>, vector<1x64xf32>
      tpu.vector_store %arg5[%c0_9, %c0_10], %12 {strides = array<i32>} : memref<1x64xf32, #tpu.memory_space<vmem>>, vector<1x64xf32>,
    } else {
    }
    %c0 = arith.constant 0 : index
    %c0_1 = arith.constant 0 : index
    %3 = vector.load %arg3[%c0, %c0_1] : memref<8x64xf32, #tpu.memory_space<vmem>>, vector<8x64xf32>
    %c0_2 = arith.constant 0 : index
    %c0_3 = arith.constant 0 : index
    %4 = vector.load %arg5[%c0_2, %c0_3] : memref<1x64xf32, #tpu.memory_space<vmem>>, vector<1x64xf32>
    %cst = arith.constant dense<0x7F800000> : vector<64xf32>
    %5 = vector.multi_reduction <minimumf>, %3, %cst [0] : vector<8x64xf32> to vector<64xf32>
    %6 = vector.shape_cast %5 : vector<64xf32> to vector<1x64xf32>
    %7 = arith.minimumf %4, %6 : vector<1x64xf32>
    %c0_4 = arith.constant 0 : index
    %c0_5 = arith.constant 0 : index
    %8 = vector.load %arg5[%c0_4, %c0_5] : memref<1x64xf32, #tpu.memory_space<vmem>>, vector<1x64xf32>
    tpu.vector_store %arg5[%c0_4, %c0_5], %7 {strides = array<i32>} : memref<1x64xf32, #tpu.memory_space<vmem>>, vector<1x64xf32>,
    %c0_i32_6 = arith.constant 0 : i32
    %9 = arith.cmpi eq, %arg1, %c0_i32_6 : i32
    %10 = arith.extui %9 : i1 to i32
    %c0_i32_7 = arith.constant 0 : i32
    %11 = arith.cmpi ne, %10, %c0_i32_7 : i32
    scf.if %11 {
      %c0_8 = arith.constant 0 : index
      %c0_9 = arith.constant 0 : index
      %12 = vector.load %arg5[%c0_8, %c0_9] : memref<1x64xf32, #tpu.memory_space<vmem>>, vector<1x64xf32>
      %c0_10 = arith.constant 0 : index
      %c0_11 = arith.constant 0 : index
      %13 = vector.load %arg4[%c0_10, %c0_11] : memref<1x64xf32, #tpu.memory_space<vmem>>, vector<1x64xf32>
      tpu.vector_store %arg4[%c0_10, %c0_11], %12 {strides = array<i32>} : memref<1x64xf32, #tpu.memory_space<vmem>>, vector<1x64xf32>,
    } else {
    }
    return
  }
  func.func @transform_0(%arg0: i32, %arg1: i32, %arg2: memref<1xf32, #tpu.memory_space<smem>>) -> (i32, i32) {
    %c0_i32 = arith.constant 0 : i32
    return %arg1, %arg0 : i32, i32
  }
  func.func @transform_1(%arg0: i32, %arg1: i32, %arg2: memref<1xf32, #tpu.memory_space<smem>>) -> (i32, i32) {
    %c0_i32 = arith.constant 0 : i32
    %c0_i32_0 = arith.constant 0 : i32
    return %c0_i32, %arg0 : i32, i32
  }
}

</mosaic_0001>

<llo_original>
// kernel: tpu_custom_call.1
$region0: #{tpu_custom_call.1}
  #allocation0 [shape = 'u32[]', space=smem, size = 0x4, offset = 0x4, fixed_abs, tag = 'smem constant byte address 0x4 - core index']
  #allocation1 [shape = 'u32[72,128]{1,0:T(1,128)}', space=vmem, size = 0x9000, scoped, tag = 'internal scratch']
  #allocation2 [shape = 'f32[1,64]{1,0:T(1,128)}', space=vmem, size = 0x200, scoped, tag = 'scratch operand']
  #allocation3 [shape = 's32[1]{0}', space=sflag, size = 0x4, scoped, tag = 'scoped memory for tpu_custom_call.1']
  #allocation4 [shape = 'f32[1]{0:T(128)S(6)}', space=smem, size = 0x200, scoped, tag = 'prefetched SMEM operand 0']
  %s0 = inlined_call_operand.<no memory space> [shape: f32[1], index: 0, kind: input, shape index: {}]
  %s1 = inlined_call_operand.hbm [shape: f32[8,64], index: 1, kind: input, shape index: {}]
  %s2 = inlined_call_operand.hbm [shape: f32[1,64], index: 2, kind: output, shape index: {}]
  %s3 = sld [smem:[#allocation0]]
  $region26: #{tpu_custom_call.1} parent=0
    _
  %s5 = ssub.s32 1, %s3
  %s6 = scalar_select 0, %s5, %s3
  %7 = sst [smem:[#allocation4]] %s0
  $region1: #{tpu_custom_call.1} parent=0
    #allocation5 [shape = 'u8[4096]{0}', space=vmem, size = 0x1000, scoped, tag = 'input window, operand 1, single buffered']
    #allocation6 [shape = 's32[1]{0}', space=sflag, size = 0x4, scoped, tag = 'scoped memory for tpu_custom_call.1']
    #allocation7 [shape = 's32[1]{0}', space=sflag, size = 0x4, scoped, tag = 'scoped memory for tpu_custom_call.1']
    #allocation8 [shape = 'u8[512]{0}', space=vmem, size = 0x400, scoped, tag = 'output window, operand 0, single buffered']
    %8 = vsyncpa [#allocation6], 0
    %9 = vsyncpa [#allocation7], 0
    // Predicated region
    $region2: #{tpu_custom_call.1} parent=1 // pred_check
      _
    $region3: #{tpu_custom_call.1} parent=1 // pred_check_branch
      %11 = sbr.rel (0) target = $region5
    $region4: #{tpu_custom_call.1} parent=1 // pred_region
      %13 = vsyncadd [#allocation6], 0
      %s15 = sshll.u32 %s1, 4
      %s16 = int_to_ptr.hbm [resolvable:$true] %s15
      %s17 = sshll.u32 [#allocation5], 4
      %s18 = int_to_ptr.vmem [resolvable:$true] %s17
      %20 = dma.hbm_to_vmem [thread:$0]  %s16, 128, %s18, [#allocation6]
    $region5: #{tpu_custom_call.1} parent=1 // pred_fallthru
      _
    // Predicated region
    $region6: #{tpu_custom_call.1} parent=1 // pred_check
      _
    $region7: #{tpu_custom_call.1} parent=1 // pred_check_branch
      %22 = sbr.rel (0) target = $region9
    $region8: #{tpu_custom_call.1} parent=1 // pred_region
      %24 = dma.done [#allocation6], 128
    $region9: #{tpu_custom_call.1} parent=1 // pred_fallthru
      _
    %p25 = scmp.eq.s32.totalorder 0, 0
    // Predicated region
    $region10: #{tpu_custom_call.1} parent=1 // pred_check
      %p26 = pneg %p25
    $region11: #{tpu_custom_call.1} parent=1 // pred_check_branch
      %28 = sbr.rel (%p26) target = $region13
    $region12: #{tpu_custom_call.1} parent=1 // pred_region
      %vm29 = vcmask 516096
      %30 = vst.msk [vmem:[#allocation2] sm:$0x1] %vm29, inf
    $region13: #{tpu_custom_call.1} parent=1 // pred_fallthru
      _
    %v31 = vld [vmem:[#allocation5] sm:$0xff]
    %v32 = vld [vmem:[#allocation2] sm:$0x1]
    %vm33 = vcmask 523264
    %v34 = vsel %vm33, %v31, inf
    %v35 = vrot.slane %v34, 4
    %v36 = vmin.f32 %v34, %v35
    %v37 = vrot.slane %v36, 2
    %v38 = vmin.f32 %v36, %v37
    %v39 = vrot.slane %v38, 1
    %v40 = vmin.f32 %v38, %v39
    %v41 = vmin.f32 %v32, %v40
    %vm42 = vcmask 516096
    %43 = vst.msk [vmem:[#allocation2] sm:$0x1] %vm42, %v41
    // Predicated region
    $region14: #{tpu_custom_call.1} parent=1 // pred_check
      %p44 = pneg %p25
    $region15: #{tpu_custom_call.1} parent=1 // pred_check_branch
      %46 = sbr.rel (%p44) target = $region17
    $region16: #{tpu_custom_call.1} parent=1 // pred_region
      %v47 = vld [vmem:[#allocation2] sm:$0x1]
      %48 = vst.msk [vmem:[#allocation8] sm:$0x1] %vm42, %v47
    $region17: #{tpu_custom_call.1} parent=1 // pred_fallthru
      _
    // Predicated region
    $region18: #{tpu_custom_call.1} parent=1 // pred_check
      _
    $region19: #{tpu_custom_call.1} parent=1 // pred_check_branch
      %50 = sbr.rel (0) target = $region21
    $region20: #{tpu_custom_call.1} parent=1 // pred_region
      %52 = vsyncadd [#allocation7], 0
      %s54 = sshll.u32 [#allocation8], 4
      %s55 = int_to_ptr.vmem [resolvable:$true] %s54
      %s56 = sshll.u32 %s2, 4
      %s57 = int_to_ptr.hbm [resolvable:$true] %s56
      %59 = dma.vmem_to_hbm [thread:$0]  %s55, 16, %s57, [#allocation7]
    $region21: #{tpu_custom_call.1} parent=1 // pred_fallthru
      _
    // Predicated region
    $region22: #{tpu_custom_call.1} parent=1 // pred_check
      _
    $region23: #{tpu_custom_call.1} parent=1 // pred_check_branch
      %61 = sbr.rel (0) target = $region25
    $region24: #{tpu_custom_call.1} parent=1 // pred_region
      %63 = dma.done [#allocation7], 16
    $region25: #{tpu_custom_call.1} parent=1 // pred_fallthru
      _
    %64 = vsyncpa [#allocation6], 1
    %65 = vsyncpa [#allocation7], 1

</llo_original>
